<compile_context>
chip_gen: v5e
topology: v5e:2x2
jax: 0.10.0
libtpu: 0.0.40
codegen_flags: <defaults>
</compile_context>

<pallas_src>
import math

import jax
import jax.numpy as jnp
from jax.experimental import pallas as pl
from jax.experimental.pallas import tpu as pltpu


_GELU_C = math.sqrt(2.0 / math.pi)


def _gelu_tanh(x):
    # PyTorch nn.GELU(approximate='tanh'):
    # 0.5 * x * (1 + tanh(sqrt(2/pi) * (x + 0.044715 * x^3)))
    return 0.5 * x * (1.0 + jnp.tanh(_GELU_C * (x + 0.044715 * x * x * x)))


# ---------------------------------------------------------------------------
# Kernels
# ---------------------------------------------------------------------------

def mlp_resident_kernel(x_ref, wfc_ref, bfc_ref, wproj_ref, bproj_ref, o_ref):
    """Weights fully VMEM-resident: one fused pass per (tm, E) row tile."""
    h = jnp.dot(x_ref[...], wfc_ref[...], preferred_element_type=jnp.float32)
    h = _gelu_tanh(h + bfc_ref[...].astype(jnp.float32))
    y = jnp.dot(h.astype(wproj_ref.dtype), wproj_ref[...],
                preferred_element_type=jnp.float32)
    o_ref[...] = (y + bproj_ref[...].astype(jnp.float32)).astype(o_ref.dtype)


def mlp_chunked_kernel(x_ref, wfc_ref, bfc_ref, wproj_ref, bproj_ref, o_ref,
                       acc_ref):
    """Hidden dim (H = 4*E) streamed in th-wide chunks.

    grid = (row tiles, H // th); axis 0 rows ("parallel"), axis 1 hidden
    chunks ("arbitrary", reduction of the second matmul).  acc_ref is a
    resident (tm, E) f32 accumulator initialized with the c_proj bias.
    """
    h_idx = pl.program_id(1)

    @pl.when(h_idx == 0)
    def _init():
        acc_ref[...] = jnp.broadcast_to(
            bproj_ref[...].astype(jnp.float32), acc_ref.shape)

    h = jnp.dot(x_ref[...], wfc_ref[...], preferred_element_type=jnp.float32)
    h = _gelu_tanh(h + bfc_ref[...].astype(jnp.float32))
    acc_ref[...] += jnp.dot(h.astype(wproj_ref.dtype), wproj_ref[...],
                            preferred_element_type=jnp.float32)

    @pl.when(h_idx == pl.num_programs(1) - 1)
    def _finalize():
        o_ref[...] = acc_ref[...].astype(o_ref.dtype)


# ---------------------------------------------------------------------------
# Wrapper
# ---------------------------------------------------------------------------

def _round_up(x, m):
    return ((x + m - 1) // m) * m


def _vmem_capacity_bytes():
    """Per-TensorCore VMEM; conservative (v7x-sized) fallback if unavailable."""
    try:
        cap = int(pltpu.get_tpu_info().vmem_capacity_bytes)
        if cap > 0:
            return cap
    except Exception:
        pass
    return 64 * 1024 * 1024


def mlp_forward(x, w_fc, b_fc, w_proj, b_proj, *, tm=None, th=None):
    """x: [B, T, E]; w_fc: [E, 4E]; b_fc: [4E]; w_proj: [4E, E]; b_proj: [E]."""
    B, T, E = x.shape
    H = w_fc.shape[1]
    M = B * T

    w_item = jnp.dtype(w_fc.dtype).itemsize
    x_item = jnp.dtype(x.dtype).itemsize
    pack = {1: 32, 2: 16}.get(x_item, 8)          # sublane packing of row dim

    cap = _vmem_capacity_bytes()
    usable = int(cap * 0.80)                       # headroom for Mosaic scratch

    def _resident_bytes(tm_):
        # Weights/biases single-buffered (constant block index), x/out
        # double-buffered, plus the (tm, H) f32 GELU intermediate.
        return ((2 * E * H + H + E) * w_item
                + 4 * tm_ * E * x_item
                + tm_ * H * 4 + tm_ * E * 4)

    def _chunked_bytes(tm_, th_):
        # Streamed W_fc / b_fc / W_proj chunks are double-buffered.
        return (2 * (2 * E * th_ + th_) * w_item + E * w_item
                + 4 * tm_ * E * x_item
                + tm_ * E * 4                      # resident f32 accumulator
                + tm_ * th_ * 4 + tm_ * E * 4)

    tm_cap = _round_up(M, pack)
    tm_user = tm

    if th is not None:
        weights_resident = (th == H)
        if tm_user is None:
            tm = min(256 if weights_resident else 512, tm_cap)
        else:
            tm = min(_round_up(tm_user, pack), tm_cap)
    else:
        tm = min(_round_up(tm_user, pack) if tm_user else 256, tm_cap)
        if _resident_bytes(tm) <= usable:
            th, weights_resident = H, True
        else:
            weights_resident = False
            if tm_user is None:
                # Bigger row tile halves per-tile weight re-streaming from HBM.
                tm = min(512, tm_cap)
            # Prefer hidden chunks that are multiples of 256 (MXU depth / DMA
            # efficiency on v6e/v7x); 128 only as a last resort.
            th = None
            cand = 256
            while cand <= H:
                if H % cand == 0 and _chunked_bytes(tm, cand) <= usable:
                    th = cand
                cand += 256
            if th is None and H % 128 == 0 and _chunked_bytes(tm, 128) <= usable:
                th = 128
            if th is None:
                th, weights_resident = H, True     # give up on chunking
    assert H % th == 0, "hidden tile must divide 4*n_embd"

    # Megacore balance (v7x): with a single row tile one TensorCore idles.
    if weights_resident and tm_user is None and -(-M // tm) == 1:
        tm2 = _round_up((M + 1) // 2, pack)
        if tm2 < M:
            tm = tm2

    x2 = x.reshape(M, E)
    need_slice = False
    M_eff = M
    if tm > M:
        # Single ragged tile smaller than one aligned block: pad the few
        # missing rows (cheap). For M >= tm the partial final block is handled
        # by Pallas masking -> no extra pad/slice memory pass.
        M_eff = tm
        x2 = jnp.pad(x2, ((0, tm - M), (0, 0)))
        need_slice = True
    n_row_tiles = -(-M_eff // tm)

    bfc2 = b_fc.reshape(1, H)
    bproj2 = b_proj.reshape(1, E)

    planned = _resident_bytes(tm) if weights_resident else _chunked_bytes(tm, th)
    vmem_limit = int(min(int(cap * 0.85),
                         max(32 * 1024 * 1024, planned + (16 << 20))))

    w_bytes = (w_fc.size + w_proj.size + b_fc.size + b_proj.size) * w_item
    w_passes = 1 if weights_resident else n_row_tiles
    cost = pl.CostEstimate(
        flops=int(4 * M_eff * E * H),                 # two matmuls
        transcendentals=int(M_eff * H),               # tanh in GELU
        bytes_accessed=int(2 * M_eff * E * x_item + w_passes * w_bytes),
    )

    def _const_spec(shape, imap, single):
        # Constant-index blocks only need one VMEM buffer.
        if single:
            return pl.BlockSpec(shape, imap, pipeline_mode=pl.Buffered(1))
        return pl.BlockSpec(shape, imap)

    def _build(single_buffer_consts):
        if weights_resident:
            grid_spec = pltpu.PrefetchScalarGridSpec(
                num_scalar_prefetch=0,
                grid=(n_row_tiles,),
                in_specs=[
                    pl.BlockSpec((tm, E), lambda i: (i, 0)),                      # x
                    _const_spec((E, H), lambda i: (0, 0), single_buffer_consts),  # W_fc
                    _const_spec((1, H), lambda i: (0, 0), single_buffer_consts),  # b_fc
                    _const_spec((H, E), lambda i: (0, 0), single_buffer_consts),  # W_proj
                    _const_spec((1, E), lambda i: (0, 0), single_buffer_consts),  # b_proj
                ],
                out_specs=pl.BlockSpec((tm, E), lambda i: (i, 0)),
            )
            kernel = mlp_resident_kernel
            dims = ("parallel",)
        else:
            grid_spec = pltpu.PrefetchScalarGridSpec(
                num_scalar_prefetch=0,
                grid=(n_row_tiles, H // th),
                in_specs=[
                    pl.BlockSpec((tm, E), lambda i, h: (i, 0)),                   # x
                    pl.BlockSpec((E, th), lambda i, h: (0, h)),                   # W_fc
                    pl.BlockSpec((1, th), lambda i, h: (0, h)),                   # b_fc
                    pl.BlockSpec((th, E), lambda i, h: (h, 0)),                   # W_proj
                    _const_spec((1, E), lambda i, h: (0, 0), single_buffer_consts),  # b_proj
                ],
                out_specs=pl.BlockSpec((tm, E), lambda i, h: (i, 0)),
                scratch_shapes=[pltpu.VMEM((tm, E), jnp.float32)],
            )
            kernel = mlp_chunked_kernel
            dims = ("parallel", "arbitrary")
        return pl.pallas_call(
            kernel,
            out_shape=jax.ShapeDtypeStruct((M_eff, E), x.dtype),
            grid_spec=grid_spec,
            compiler_params=pltpu.CompilerParams(
                dimension_semantics=dims,
                vmem_limit_bytes=vmem_limit,
            ),
            cost_estimate=cost,
        )

    try:
        out2 = _build(True)(x2, w_fc, bfc2, w_proj, bproj2)
    except Exception:
        # Retry only with default (double) buffering for the constant blocks;
        # any genuine lowering/shape error re-raises from this second build.
        out2 = _build(False)(x2, w_fc, bfc2, w_proj, bproj2)

    if need_slice:
        out2 = out2[:M]
    return out2.reshape(B, T, E)


# ---------------------------------------------------------------------------
# Reference + tests
# ---------------------------------------------------------------------------

def mlp_reference(x, w_fc, b_fc, w_proj, b_proj):
    xf = x.astype(jnp.float32)
    h = jnp.einsum("bte,eh->bth", xf, w_fc.astype(jnp.float32),
                   precision=jax.lax.Precision.HIGHEST) + b_fc.astype(jnp.float32)
    h = _gelu_tanh(h)
    y = jnp.einsum("bth,he->bte", h, w_proj.astype(jnp.float32),
                   precision=jax.lax.Precision.HIGHEST) + b_proj.astype(jnp.float32)
    return y.astype(x.dtype)


def _make_inputs(key, B, T, E, dtype):
    H = 4 * E
    kx, kw1, kb1, kw2, kb2 = jax.random.split(key, 5)
    x = jax.random.normal(kx, (B, T, E), dtype=jnp.float32)
    w_fc = jax.random.normal(kw1, (E, H), dtype=jnp.float32) / math.sqrt(E)
    b_fc = jax.random.normal(kb1, (H,), dtype=jnp.float32) * 0.5
    w_proj = jax.random.normal(kw2, (H, E), dtype=jnp.float32) / math.sqrt(H)
    b_proj = jax.random.normal(kb2, (E,), dtype=jnp.float32) * 0.5
    return tuple(a.astype(dtype) for a in (x, w_fc, b_fc, w_proj, b_proj))


if __name__ == "__main__":
    k1, k2 = jax.random.split(jax.random.PRNGKey(0))

    # Tolerances allow for MXU bf16-pass matmul precision on either side;
    # biases are scaled large enough that structural bugs would be caught.

    # 1) Small GPT-2-like config, f32 (B=2, T=8, n_embd=32 -> H=128): resident
    #    weights, rows split across two tiles.
    args = _make_inputs(k1, 2, 8, 32, jnp.float32)
    out = jax.block_until_ready(mlp_forward(*args))
    ref = mlp_reference(*args)
    assert out.shape == ref.shape
    assert jnp.allclose(out, ref, atol=1e-2, rtol=1e-2), "f32 mismatch vs reference"

    # 2) bf16 operands: native MXU dtype, f32 accumulation inside the kernel.
    args_bf16 = tuple(a.astype(jnp.bfloat16) for a in args)
    out_bf16 = jax.block_until_ready(mlp_forward(*args_bf16))
    ref_bf16 = mlp_reference(*args_bf16).astype(jnp.float32)
    assert jnp.allclose(out_bf16.astype(jnp.float32), ref_bf16,
                        atol=7.5e-2, rtol=7.5e-2), "bf16 mismatch vs reference"

    # 3) Ragged row count (M=158) with a forced hidden-chunked reduction path:
    #    tm=64 -> row tiles of 64/64/30 valid rows (partial-block masking, no
    #    pad pass), th=128 -> 4 hidden chunks through the f32 accumulator.
    args3 = _make_inputs(k2, 2, 79, 128, jnp.float32)
    out3 = jax.block_until_ready(mlp_forward(*args3, tm=64, th=128))
    ref3 = mlp_reference(*args3)
    assert out3.shape == ref3.shape
    assert jnp.allclose(out3, ref3, atol=1e-2, rtol=1e-2), "chunked-H mismatch"

    print("KERNEL_OK")
</pallas_src>

<mosaic_0001>
module attributes {stable_mosaic.version = 11 : i64} {
  func.func @mlp_resident_kernel(%arg0: i32, %arg1: memref<8x32xf32, #tpu.memory_space<vmem>>, %arg2: memref<32x128xf32, #tpu.memory_space<vmem>>, %arg3: memref<1x128xf32, #tpu.memory_space<vmem>>, %arg4: memref<128x32xf32, #tpu.memory_space<vmem>>, %arg5: memref<1x32xf32, #tpu.memory_space<vmem>>, %arg6: memref<8x32xf32, #tpu.memory_space<vmem>>) attributes {dimension_semantics = [#tpu.dimension_semantics<parallel>], iteration_bounds = array<i64: 2>, scalar_prefetch = 0 : i64, scratch_operands = 0 : i64, tpu.core_type = #tpu.core_type<tc>, window_params = [{transform_indices = @transform_0, window_bounds = array<i64: 8, 32>}, {pipeline_mode = #tpu.pipeline_mode<synchronous>, transform_indices = @transform_1, window_bounds = array<i64: 32, 128>}, {pipeline_mode = #tpu.pipeline_mode<synchronous>, transform_indices = @transform_2, window_bounds = array<i64: 1, 128>}, {pipeline_mode = #tpu.pipeline_mode<synchronous>, transform_indices = @transform_3, window_bounds = array<i64: 128, 32>}, {pipeline_mode = #tpu.pipeline_mode<synchronous>, transform_indices = @transform_4, window_bounds = array<i64: 1, 32>}, {transform_indices = @transform_5, window_bounds = array<i64: 8, 32>}]} {
    %c0 = arith.constant 0 : index
    %c0_0 = arith.constant 0 : index
    %0 = vector.load %arg1[%c0, %c0_0] : memref<8x32xf32, #tpu.memory_space<vmem>>, vector<8x32xf32>
    %c0_1 = arith.constant 0 : index
    %c0_2 = arith.constant 0 : index
    %1 = vector.load %arg2[%c0_1, %c0_2] : memref<32x128xf32, #tpu.memory_space<vmem>>, vector<32x128xf32>
    %cst = arith.constant dense<0.000000e+00> : vector<8x128xf32>
    %2 = tpu.matmul %0, %1, %cst {dimension_numbers = #tpu.dot_dimension_numbers<[1], [0], [0], [1], [0, 0, 1, 1], [], []>} : vector<8x32xf32>, vector<32x128xf32>, vector<8x128xf32> -> vector<8x128xf32>
    %c0_3 = arith.constant 0 : index
    %c0_4 = arith.constant 0 : index
    %3 = vector.load %arg3[%c0_3, %c0_4] : memref<1x128xf32, #tpu.memory_space<vmem>>, vector<1x128xf32>
    %4 = vector.broadcast %3 : vector<1x128xf32> to vector<8x128xf32>
    %5 = arith.addf %2, %4 : vector<8x128xf32>
    %cst_5 = arith.constant 5.000000e-01 : f32
    %6 = vector.broadcast %cst_5 : f32 to vector<8x128xf32>
    %7 = arith.mulf %6, %5 : vector<8x128xf32>
    %cst_6 = arith.constant 4.471500e-02 : f32
    %8 = vector.broadcast %cst_6 : f32 to vector<8x128xf32>
    %9 = arith.mulf %8, %5 : vector<8x128xf32>
    %10 = arith.mulf %9, %5 : vector<8x128xf32>
    %11 = arith.mulf %10, %5 : vector<8x128xf32>
    %12 = arith.addf %5, %11 : vector<8x128xf32>
    %cst_7 = arith.constant 0.797884583 : f32
    %13 = vector.broadcast %cst_7 : f32 to vector<8x128xf32>
    %14 = arith.mulf %13, %12 : vector<8x128xf32>
    %15 = math.tanh %14 : vector<8x128xf32>
    %cst_8 = arith.constant 1.000000e+00 : f32
    %16 = vector.broadcast %cst_8 : f32 to vector<8x128xf32>
    %17 = arith.addf %16, %15 : vector<8x128xf32>
    %18 = arith.mulf %7, %17 : vector<8x128xf32>
    %c0_9 = arith.constant 0 : index
    %c0_10 = arith.constant 0 : index
    %19 = vector.load %arg4[%c0_9, %c0_10] : memref<128x32xf32, #tpu.memory_space<vmem>>, vector<128x32xf32>
    %cst_11 = arith.constant dense<0.000000e+00> : vector<8x32xf32>
    %20 = tpu.matmul %18, %19, %cst_11 {dimension_numbers = #tpu.dot_dimension_numbers<[1], [0], [0], [1], [0, 0, 1, 1], [], []>} : vector<8x128xf32>, vector<128x32xf32>, vector<8x32xf32> -> vector<8x32xf32>
    %c0_12 = arith.constant 0 : index
    %c0_13 = arith.constant 0 : index
    %21 = vector.load %arg5[%c0_12, %c0_13] : memref<1x32xf32, #tpu.memory_space<vmem>>, vector<1x32xf32>
    %22 = vector.broadcast %21 : vector<1x32xf32> to vector<8x32xf32>
    %23 = arith.addf %20, %22 : vector<8x32xf32>
    %c0_14 = arith.constant 0 : index
    %c0_15 = arith.constant 0 : index
    %24 = vector.load %arg6[%c0_14, %c0_15] : memref<8x32xf32, #tpu.memory_space<vmem>>, vector<8x32xf32>
    tpu.vector_store %arg6[%c0_14, %c0_15], %23 {strides = array<i32>} : memref<8x32xf32, #tpu.memory_space<vmem>>, vector<8x32xf32>,
    return
  }
  func.func @transform_0(%arg0: i32) -> (i32, i32) {
    %c0_i32 = arith.constant 0 : i32
    %c0_i32_0 = arith.constant 0 : i32
    return %arg0, %c0_i32 : i32, i32
  }
  func.func @transform_1(%arg0: i32) -> (i32, i32) {
    %c0_i32 = arith.constant 0 : i32
    %c0_i32_0 = arith.constant 0 : i32
    %c0_i32_1 = arith.constant 0 : i32
    return %c0_i32, %c0_i32_0 : i32, i32
  }
  func.func @transform_2(%arg0: i32) -> (i32, i32) {
    %c0_i32 = arith.constant 0 : i32
    %c0_i32_0 = arith.constant 0 : i32
    %c0_i32_1 = arith.constant 0 : i32
    return %c0_i32, %c0_i32_0 : i32, i32
  }
  func.func @transform_3(%arg0: i32) -> (i32, i32) {
    %c0_i32 = arith.constant 0 : i32
    %c0_i32_0 = arith.constant 0 : i32
    %c0_i32_1 = arith.constant 0 : i32
    return %c0_i32, %c0_i32_0 : i32, i32
  }
  func.func @transform_4(%arg0: i32) -> (i32, i32) {
    %c0_i32 = arith.constant 0 : i32
    %c0_i32_0 = arith.constant 0 : i32
    %c0_i32_1 = arith.constant 0 : i32
    return %c0_i32, %c0_i32_0 : i32, i32
  }
  func.func @transform_5(%arg0: i32) -> (i32, i32) {
    %c0_i32 = arith.constant 0 : i32
    %c0_i32_0 = arith.constant 0 : i32
    return %arg0, %c0_i32 : i32, i32
  }
}

module attributes {stable_mosaic.version = 11 : i64} {
  func.func @mlp_resident_kernel(%arg0: i32, %arg1: memref<8x32xf32, #tpu.memory_space<vmem>>, %arg2: memref<32x128xf32, #tpu.memory_space<vmem>>, %arg3: memref<1x128xf32, #tpu.memory_space<vmem>>, %arg4: memref<128x32xf32, #tpu.memory_space<vmem>>, %arg5: memref<1x32xf32, #tpu.memory_space<vmem>>, %arg6: memref<8x32xf32, #tpu.memory_space<vmem>>) attributes {dimension_semantics = [#tpu.dimension_semantics<parallel>], iteration_bounds = array<i64: 2>, scalar_prefetch = 0 : i64, scratch_operands = 0 : i64, tpu.core_type = #tpu.core_type<tc>, window_params = [{transform_indices = @transform_0, window_bounds = array<i64: 8, 32>}, {pipeline_mode = #tpu.pipeline_mode<synchronous>, transform_indices = @transform_1, window_bounds = array<i64: 32, 128>}, {pipeline_mode = #tpu.pipeline_mode<synchronous>, transform_indices = @transform_2, window_bounds = array<i64: 1, 128>}, {pipeline_mode = #tpu.pipeline_mode<synchronous>, transform_indices = @transform_3, window_bounds = array<i64: 128, 32>}, {pipeline_mode = #tpu.pipeline_mode<synchronous>, transform_indices = @transform_4, window_bounds = array<i64: 1, 32>}, {transform_indices = @transform_5, window_bounds = array<i64: 8, 32>}]} {
    %c0 = arith.constant 0 : index
    %c0_0 = arith.constant 0 : index
    %0 = vector.load %arg1[%c0, %c0_0] : memref<8x32xf32, #tpu.memory_space<vmem>>, vector<8x32xf32>
    %c0_1 = arith.constant 0 : index
    %c0_2 = arith.constant 0 : index
    %1 = vector.load %arg2[%c0_1, %c0_2] : memref<32x128xf32, #tpu.memory_space<vmem>>, vector<32x128xf32>
    %cst = arith.constant dense<0.000000e+00> : vector<8x128xf32>
    %2 = tpu.matmul %0, %1, %cst {dimension_numbers = #tpu.dot_dimension_numbers<[1], [0], [0], [1], [0, 0, 1, 1], [], []>} : vector<8x32xf32>, vector<32x128xf32>, vector<8x128xf32> -> vector<8x128xf32>
    %c0_3 = arith.constant 0 : index
    %c0_4 = arith.constant 0 : index
    %3 = vector.load %arg3[%c0_3, %c0_4] : memref<1x128xf32, #tpu.memory_space<vmem>>, vector<1x128xf32>
    %4 = vector.broadcast %3 : vector<1x128xf32> to vector<8x128xf32>
    %5 = arith.addf %2, %4 : vector<8x128xf32>
    %cst_5 = arith.constant 5.000000e-01 : f32
    %6 = vector.broadcast %cst_5 : f32 to vector<8x128xf32>
    %7 = arith.mulf %6, %5 : vector<8x128xf32>
    %cst_6 = arith.constant 4.471500e-02 : f32
    %8 = vector.broadcast %cst_6 : f32 to vector<8x128xf32>
    %9 = arith.mulf %8, %5 : vector<8x128xf32>
    %10 = arith.mulf %9, %5 : vector<8x128xf32>
    %11 = arith.mulf %10, %5 : vector<8x128xf32>
    %12 = arith.addf %5, %11 : vector<8x128xf32>
    %cst_7 = arith.constant 0.797884583 : f32
    %13 = vector.broadcast %cst_7 : f32 to vector<8x128xf32>
    %14 = arith.mulf %13, %12 : vector<8x128xf32>
    %15 = math.tanh %14 : vector<8x128xf32>
    %cst_8 = arith.constant 1.000000e+00 : f32
    %16 = vector.broadcast %cst_8 : f32 to vector<8x128xf32>
    %17 = arith.addf %16, %15 : vector<8x128xf32>
    %18 = arith.mulf %7, %17 : vector<8x128xf32>
    %c0_9 = arith.constant 0 : index
    %c0_10 = arith.constant 0 : index
    %19 = vector.load %arg4[%c0_9, %c0_10] : memref<128x32xf32, #tpu.memory_space<vmem>>, vector<128x32xf32>
    %cst_11 = arith.constant dense<0.000000e+00> : vector<8x32xf32>
    %20 = tpu.matmul %18, %19, %cst_11 {dimension_numbers = #tpu.dot_dimension_numbers<[1], [0], [0], [1], [0, 0, 1, 1], [], []>} : vector<8x128xf32>, vector<128x32xf32>, vector<8x32xf32> -> vector<8x32xf32>
    %c0_12 = arith.constant 0 : index
    %c0_13 = arith.constant 0 : index
    %21 = vector.load %arg5[%c0_12, %c0_13] : memref<1x32xf32, #tpu.memory_space<vmem>>, vector<1x32xf32>
    %22 = vector.broadcast %21 : vector<1x32xf32> to vector<8x32xf32>
    %23 = arith.addf %20, %22 : vector<8x32xf32>
    %c0_14 = arith.constant 0 : index
    %c0_15 = arith.constant 0 : index
    %24 = vector.load %arg6[%c0_14, %c0_15] : memref<8x32xf32, #tpu.memory_space<vmem>>, vector<8x32xf32>
    tpu.vector_store %arg6[%c0_14, %c0_15], %23 {strides = array<i32>} : memref<8x32xf32, #tpu.memory_space<vmem>>, vector<8x32xf32>,
    return
  }
  func.func @transform_0(%arg0: i32) -> (i32, i32) {
    %c0_i32 = arith.constant 0 : i32
    %c0_i32_0 = arith.constant 0 : i32
    return %arg0, %c0_i32 : i32, i32
  }
  func.func @transform_1(%arg0: i32) -> (i32, i32) {
    %c0_i32 = arith.constant 0 : i32
    %c0_i32_0 = arith.constant 0 : i32
    %c0_i32_1 = arith.constant 0 : i32
    return %c0_i32, %c0_i32_0 : i32, i32
  }
  func.func @transform_2(%arg0: i32) -> (i32, i32) {
    %c0_i32 = arith.constant 0 : i32
    %c0_i32_0 = arith.constant 0 : i32
    %c0_i32_1 = arith.constant 0 : i32
    return %c0_i32, %c0_i32_0 : i32, i32
  }
  func.func @transform_3(%arg0: i32) -> (i32, i32) {
    %c0_i32 = arith.constant 0 : i32
    %c0_i32_0 = arith.constant 0 : i32
    %c0_i32_1 = arith.constant 0 : i32
    return %c0_i32, %c0_i32_0 : i32, i32
  }
  func.func @transform_4(%arg0: i32) -> (i32, i32) {
    %c0_i32 = arith.constant 0 : i32
    %c0_i32_0 = arith.constant 0 : i32
    %c0_i32_1 = arith.constant 0 : i32
    return %c0_i32, %c0_i32_0 : i32, i32
  }
  func.func @transform_5(%arg0: i32) -> (i32, i32) {
    %c0_i32 = arith.constant 0 : i32
    %c0_i32_0 = arith.constant 0 : i32
    return %arg0, %c0_i32 : i32, i32
  }
}

</mosaic_0001>

<llo_original>
// kernel: tpu_custom_call.1
$region0: #{tpu_custom_call.1}
  #allocation0 [shape = 'u32[]', space=smem, size = 0x4, offset = 0x4, fixed_abs, tag = 'smem constant byte address 0x4 - core index']
  #allocation1 [shape = 'u32[72,128]{1,0:T(1,128)}', space=vmem, size = 0x9000, scoped, tag = 'internal scratch']
  %s0 = inlined_call_operand.vmem [shape: f32[16,32], index: 0, kind: input, shape index: {}]
  %s1 = inlined_call_operand.vmem [shape: f32[32,128], index: 1, kind: input, shape index: {}]
  %s2 = inlined_call_operand.vmem [shape: f32[1,128], index: 2, kind: input, shape index: {}]
  %s3 = inlined_call_operand.vmem [shape: f32[128,32], index: 3, kind: input, shape index: {}]
  %s4 = inlined_call_operand.vmem [shape: f32[1,32], index: 4, kind: input, shape index: {}]
  %s5 = inlined_call_operand.hbm [shape: f32[16,32], index: 5, kind: output, shape index: {}]
  %s6 = sld [smem:[#allocation0]]
  $region53: #{tpu_custom_call.1} parent=0
    _
  %s8 = ssub.s32 1, %s6
  %s9 = scalar_select 0, %s8, %s6
  $region1: #{tpu_custom_call.1} parent=0
    #allocation2 [shape = 'u8[8192]{0}', space=vmem, size = 0x2000, scoped, tag = 'output window, operand 0']
    #allocation3 [shape = 's32[2]{0}', space=sflag, size = 0x8, scoped, tag = 'scoped memory for tpu_custom_call.1']
    %10 = vsyncpa [#allocation3], 0
    %s11 = scalar_lea.sflag [#allocation3], 1
    %12 = vsyncpa %s11, 0
    loop: start=0, step=1, limit=4
    $region2: #{tpu_custom_call.1} parent=1 // loop_pre_header
      _
    $region3: #{tpu_custom_call.1} parent=1 // loop_header
      %s14 = sphi 0, %s18
      %p15 = scmp.ge.s32.totalorder %s14, 4
      %s24 = sphi 0, %s26
      %s27 = sphi 0, %s24
      %s28 = sphi 0, %s27
      %s44 = sphi 0, %s28
      %s48 = sphi 0, %s48
      %s50 = sphi 0, %s48
      %s51 = sphi 0, %s50
      %s65 = sphi 0, %s51
      %s69 = sphi 0, %s69
      %s71 = sphi 0, %s69
      %s72 = sphi 0, %s71
      %s86 = sphi 0, %s72
      %s90 = sphi 0, %s90
      %s92 = sphi 0, %s90
      %s93 = sphi 0, %s92
      %s107 = sphi 0, %s93
      %s111 = sphi 0, %s111
      %s113 = sphi 0, %s111
      %s114 = sphi 0, %s113
      %s128 = sphi 0, %s114
      %s134 = sphi 0, %s136
      %s137 = sphi 0, %s134
      %s138 = sphi 0, %s137
      %s154 = sphi 0, %s138
    $region4: #{tpu_custom_call.1} parent=1 // loop_header_branch
      %17 = sbr.rel (%p15) target = $region8
    $region5: #{tpu_custom_call.1} parent=1 // loop_body
      %s19 = ssub.s32 %s14, 1
      %s20 = ssub.s32 %s14, 2
      %s21 = sadd.s32 %s14, 1
      %s22 = ssub.s32 %s14, %s21
      %p23 = scmp.eq.s32.totalorder %s22, 0
      %s25 = sadd.s32 %s24, 1
      %s26 = scalar_select %p23, %s24, %s25
      %p29 = pneg %p23
      %p30 = scmp.eq.s32.totalorder %s14, 1
      %p31 = por %p29, %p30
      %p32 = scmp.ne.s32.totalorder %s24, %s27
      %p33 = scmp.eq.s32.totalorder %s14, 0
      %p34 = por %p32, %p33
      %p35 = scmp.ne.s32.totalorder %s24, %s27
      %p36 = scmp.eq.s32.totalorder %s19, 1
      %p37 = por %p35, %p36
      %p38 = scmp.ne.s32.totalorder %s27, %s28
      %p39 = scmp.eq.s32.totalorder %s19, 0
      %p40 = por %p38, %p39
      %p41 = scmp.ne.s32.totalorder %s27, %s28
      %p42 = scmp.eq.s32.totalorder %s20, 1
      %p43 = por %p41, %p42
      %p45 = scmp.ne.s32.totalorder %s28, %s44
      %p46 = scmp.eq.s32.totalorder %s20, 0
      %p47 = por %p45, %p46
      %s49 = sadd.s32 %s48, 1
      %p52 = scmp.eq.s32.totalorder %s14, 1
      %p53 = scmp.ne.s32.totalorder %s48, %s50
      %p54 = scmp.eq.s32.totalorder %s14, 0
      %p55 = por %p53, %p54
      %p56 = scmp.ne.s32.totalorder %s48, %s50
      %p57 = scmp.eq.s32.totalorder %s19, 1
      %p58 = por %p56, %p57
      %p59 = scmp.ne.s32.totalorder %s50, %s51
      %p60 = scmp.eq.s32.totalorder %s19, 0
      %p61 = por %p59, %p60
      %p62 = scmp.ne.s32.totalorder %s50, %s51
      %p63 = scmp.eq.s32.totalorder %s20, 1
      %p64 = por %p62, %p63
      %p66 = scmp.ne.s32.totalorder %s51, %s65
      %p67 = scmp.eq.s32.totalorder %s20, 0
      %p68 = por %p66, %p67
      %s70 = sadd.s32 %s69, 1
      %p73 = scmp.eq.s32.totalorder %s14, 1
      %p74 = scmp.ne.s32.totalorder %s69, %s71
      %p75 = scmp.eq.s32.totalorder %s14, 0
      %p76 = por %p74, %p75
      %p77 = scmp.ne.s32.totalorder %s69, %s71
      %p78 = scmp.eq.s32.totalorder %s19, 1
      %p79 = por %p77, %p78
      %p80 = scmp.ne.s32.totalorder %s71, %s72
      %p81 = scmp.eq.s32.totalorder %s19, 0
      %p82 = por %p80, %p81
      %p83 = scmp.ne.s32.totalorder %s71, %s72
      %p84 = scmp.eq.s32.totalorder %s20, 1
      %p85 = por %p83, %p84
      %p87 = scmp.ne.s32.totalorder %s72, %s86
      %p88 = scmp.eq.s32.totalorder %s20, 0
      %p89 = por %p87, %p88
      %s91 = sadd.s32 %s90, 1
      %p94 = scmp.eq.s32.totalorder %s14, 1
      %p95 = scmp.ne.s32.totalorder %s90, %s92
      %p96 = scmp.eq.s32.totalorder %s14, 0
      %p97 = por %p95, %p96
      %p98 = scmp.ne.s32.totalorder %s90, %s92
      %p99 = scmp.eq.s32.totalorder %s19, 1
      %p100 = por %p98, %p99
      %p101 = scmp.ne.s32.totalorder %s92, %s93
      %p102 = scmp.eq.s32.totalorder %s19, 0
      %p103 = por %p101, %p102
      %p104 = scmp.ne.s32.totalorder %s92, %s93
      %p105 = scmp.eq.s32.totalorder %s20, 1
      %p106 = por %p104, %p105
      %p108 = scmp.ne.s32.totalorder %s93, %s107
      %p109 = scmp.eq.s32.totalorder %s20, 0
      %p110 = por %p108, %p109
      %s112 = sadd.s32 %s111, 1
      %p115 = scmp.eq.s32.totalorder %s14, 1
      %p116 = scmp.ne.s32.totalorder %s111, %s113
      %p117 = scmp.eq.s32.totalorder %s14, 0
      %p118 = por %p116, %p117
      %p119 = scmp.ne.s32.totalorder %s111, %s113
      %p120 = scmp.eq.s32.totalorder %s19, 1
      %p121 = por %p119, %p120
      %p122 = scmp.ne.s32.totalorder %s113, %s114
      %p123 = scmp.eq.s32.totalorder %s19, 0
      %p124 = por %p122, %p123
      %p125 = scmp.ne.s32.totalorder %s113, %s114
      %p126 = scmp.eq.s32.totalorder %s20, 1
      %p127 = por %p125, %p126
      %p129 = scmp.ne.s32.totalorder %s114, %s128
      %p130 = scmp.eq.s32.totalorder %s20, 0
      %p131 = por %p129, %p130
      %s132 = ssub.s32 %s14, %s21
      %p133 = scmp.eq.s32.totalorder %s132, 0
      %s135 = sadd.s32 %s134, 1
      %s136 = scalar_select %p133, %s134, %s135
      %p139 = pneg %p133
      %p140 = scmp.eq.s32.totalorder %s14, 1
      %p141 = por %p139, %p140
      %p142 = scmp.ne.s32.totalorder %s134, %s137
      %p143 = scmp.eq.s32.totalorder %s14, 0
      %p144 = por %p142, %p143
      %p145 = scmp.ne.s32.totalorder %s134, %s137
      %p146 = scmp.eq.s32.totalorder %s19, 1
      %p147 = por %p145, %p146
      %p148 = scmp.ne.s32.totalorder %s137, %s138
      %p149 = scmp.eq.s32.totalorder %s19, 0
      %p150 = por %p148, %p149
      %p151 = scmp.ne.s32.totalorder %s137, %s138
      %p152 = scmp.eq.s32.totalorder %s20, 1
      %p153 = por %p151, %p152
      %p155 = scmp.ne.s32.totalorder %s138, %s154
      %p156 = scmp.eq.s32.totalorder %s20, 0
      %p157 = por %p155, %p156
      %p158 = scmp.le.s32.totalorder 1, %s14
      %p159 = scmp.lt.s32.totalorder %s14, 3
      %p160 = pnand %p158, %p159
      %p161 = pneg %p160
      // Predicated region
      $region9: #{tpu_custom_call.1} parent=5 // pred_check
        _
      $region10: #{tpu_custom_call.1} parent=5 // pred_check_branch
        %163 = sbr.rel (%p160) target = $region12
      $region11: #{tpu_custom_call.1} parent=5 // pred_region
        %s164 = ssub.s32 %s14, 1
        // Predicated region
        $region13: #{tpu_custom_call.1} parent=11 // pred_check
          %p165 = pneg %p61
        $region14: #{tpu_custom_call.1} parent=11 // pred_check_branch
          %167 = sbr.rel (%p165) target = $region16
        $region15: #{tpu_custom_call.1} parent=11 // pred_region
          _
        $region16: #{tpu_custom_call.1} parent=11 // pred_fallthru
          _
        // Predicated region
        $region17: #{tpu_custom_call.1} parent=11 // pred_check
          %p168 = pneg %p82
        $region18: #{tpu_custom_call.1} parent=11 // pred_check_branch
          %170 = sbr.rel (%p168) target = $region20
        $region19: #{tpu_custom_call.1} parent=11 // pred_region
          _
        $region20: #{tpu_custom_call.1} parent=11 // pred_fallthru
          _
        // Predicated region
        $region21: #{tpu_custom_call.1} parent=11 // pred_check
          %p171 = pneg %p103
        $region22: #{tpu_custom_call.1} parent=11 // pred_check_branch
          %173 = sbr.rel (%p171) target = $region24
        $region23: #{tpu_custom_call.1} parent=11 // pred_region
          _
        $region24: #{tpu_custom_call.1} parent=11 // pred_fallthru
          _
        // Predicated region
        $region25: #{tpu_custom_call.1} parent=11 // pred_check
          %p174 = pneg %p124
        $region26: #{tpu_custom_call.1} parent=11 // pred_check_branch
          %176 = sbr.rel (%p174) target = $region28
        $region27: #{tpu_custom_call.1} parent=11 // pred_region
          _
        $region28: #{tpu_custom_call.1} parent=11 // pred_fallthru
          _
      $region12: #{tpu_custom_call.1} parent=5 // pred_fallthru
        _
      %p177 = scmp.lt.s32.totalorder %s14, 2
      // Predicated region
      $region29: #{tpu_custom_call.1} parent=5 // pred_check
        %p178 = pneg %p177
      $region30: #{tpu_custom_call.1} parent=5 // pred_check_branch
        %180 = sbr.rel (%p178) target = $region32
      $region31: #{tpu_custom_call.1} parent=5 // pred_region
        // Predicated region
        $region33: #{tpu_custom_call.1} parent=31 // pred_check
          %p181 = pneg %p34
        $region34: #{tpu_custom_call.1} parent=31 // pred_check_branch
          %183 = sbr.rel (%p181) target = $region36
        $region35: #{tpu_custom_call.1} parent=31 // pred_region
          %p184 = scmp.lt.s32.totalorder %s14, 1
          %s185 = scalar_select %p184, %s14, 1
          %s186 = smul.addr %s185, 8
          %s187 = scalar_lea.vmem %s0, %s186
        $region36: #{tpu_custom_call.1} parent=31 // pred_fallthru
          _
      $region32: #{tpu_custom_call.1} parent=5 // pred_fallthru
        _
      %p188 = scmp.le.s32.totalorder 1, %s14
      %p189 = scmp.lt.s32.totalorder %s14, 3
      %p190 = pnand %p188, %p189
      %p191 = pneg %p190
      // Predicated region
      $region37: #{tpu_custom_call.1} parent=5 // pred_check
        _
      $region38: #{tpu_custom_call.1} parent=5 // pred_check_branch
        %193 = sbr.rel (%p190) target = $region40
      $region39: #{tpu_custom_call.1} parent=5 // pred_region
        %s194 = ssub.s32 %s14, 1
        %p195 = scmp.lt.s32.totalorder %s19, 1
        %s196 = scalar_select %p195, %s19, 1
        %s197 = smul.addr %s196, 8
        %s198 = scalar_lea.vmem %s0, %s197
        %p199 = pneg %p40
        %p200 = pneg %p37
        %p201 = pneg %p61
        %p202 = pneg %p58
        %p203 = pneg %p82
        %p204 = pneg %p79
        %p205 = pneg %p103
        %p206 = pneg %p100
        %p207 = pneg %p124
        %p208 = pneg %p121
        %p209 = pneg %p150
        %p210 = pneg %p147
        %s211 = sand.u32 %s137, 1
        %s212 = scalar_lea.sflag [#allocation3], %s211
        %s213 = sand.u32 %s137, 1
        %s214 = smul.addr %s213, 8
        %s215 = scalar_lea.vmem [#allocation2], %s214
        %p216 = scmp.lt.s32.totalorder %s19, 1
        %s217 = scalar_select %p216, %s19, 1
        %s218 = smul.addr %s217, 8
        %s219 = scalar_lea.vmem %s0, %s218
        %v220 = vld [vmem:[%s219] sm:$0xff]
        %v221 = vld [vmem:[%s1] sm:$0xff]
        %v222 = vld [vmem:[%s1 + $0x8] sm:$0xff]
        %v223 = vld [vmem:[%s1 + $0x10] sm:$0xff]
        %v224 = vld [vmem:[%s1 + $0x18] sm:$0xff]
        %v225 = vld [vmem:[%s2] sm:$0x1]
        %v227 = vperm.slane %v225, 0
        %vm229 = vcmask 261120
        %v231 = vsel %vm229, %v220, 0
        %233 = vmatpush.msra.mxu0 0.0
        %234 = vmatpush.msra.mxu0 0.0
        %235 = vmatpush.msra.mxu0 0.0
        %236 = vmatpush.msra.mxu0 0.0
        %237 = vmatpush.msra.mxu0 0.0
        %238 = vmatpush.msra.mxu0 0.0
        %239 = vmatpush.msra.mxu0 0.0
        %240 = vmatpush.msra.mxu0 0.0
        %241 = vmatpush.msra.mxu0 0.0
        %242 = vmatpush.msra.mxu0 0.0
        %243 = vmatpush.msra.mxu0 0.0
        %244 = vmatpush.msra.mxu0 0.0
        %245 = vmatpush.msra.mxu0 %v224
        %246 = vmatpush.msra.mxu0 %v223
        %247 = vmatpush.msra.mxu0 %v222
        %248 = vmatpush.msra.mxu0 %v221
        %249 = vmatmul.f32.gmra.mxu0 %v231
        %v250 = vpop.f32.mrf.mxu0
        %v251 = vadd.f32 %v227, %v250
        %252 = vdwg.mxu0
        %v253 = vmul.f32 %v251, 0.5
        %v254 = vmul.f32 %v251, 0.044715
        %v255 = vmul.f32 %v254, %v251
        %v256 = vmul.f32 %v255, %v251
        %v257 = vadd.f32 %v251, %v256
        %v258 = vmul.f32 %v257, 0.7978846
        %v259 = vtanh.pop %v258
        %v260 = vadd.f32 %v259, 1.0
        %v261 = vmul.f32 %v253, %v260
        %v262 = vld [vmem:[%s3] sm:$0xff]
        %v263 = vld [vmem:[%s3 + $0x8] sm:$0xff]
        %v264 = vld [vmem:[%s3 + $0x10] sm:$0xff]
        %v265 = vld [vmem:[%s3 + $0x18] sm:$0xff]
        %v266 = vld [vmem:[%s3 + $0x20] sm:$0xff]
        %v267 = vld [vmem:[%s3 + $0x28] sm:$0xff]
        %v268 = vld [vmem:[%s3 + $0x30] sm:$0xff]
        %v269 = vld [vmem:[%s3 + $0x38] sm:$0xff]
        %v270 = vld [vmem:[%s3 + $0x40] sm:$0xff]
        %v271 = vld [vmem:[%s3 + $0x48] sm:$0xff]
        %v272 = vld [vmem:[%s3 + $0x50] sm:$0xff]
        %v273 = vld [vmem:[%s3 + $0x58] sm:$0xff]
        %v274 = vld [vmem:[%s3 + $0x60] sm:$0xff]
        %v275 = vld [vmem:[%s3 + $0x68] sm:$0xff]
        %v276 = vld [vmem:[%s3 + $0x70] sm:$0xff]
        %v277 = vld [vmem:[%s3 + $0x78] sm:$0xff]
        %v278 = vld [vmem:[%s4] sm:$0x1]
        %v280 = vperm.slane %v278, 0
        %282 = vmatpush.msra.mxu0 %v277
        %283 = vmatpush.msra.mxu0 %v276
        %284 = vmatpush.msra.mxu0 %v275
        %285 = vmatpush.msra.mxu0 %v274
        %286 = vmatpush.msra.mxu0 %v273
        %287 = vmatpush.msra.mxu0 %v272
        %288 = vmatpush.msra.mxu0 %v271
        %289 = vmatpush.msra.mxu0 %v270
        %290 = vmatpush.msra.mxu0 %v269
        %291 = vmatpush.msra.mxu0 %v268
        %292 = vmatpush.msra.mxu0 %v267
        %293 = vmatpush.msra.mxu0 %v266
        %294 = vmatpush.msra.mxu0 %v265
        %295 = vmatpush.msra.mxu0 %v264
        %296 = vmatpush.msra.mxu0 %v263
        %297 = vmatpush.msra.mxu0 %v262
        %298 = vmatmul.f32.gmra.mxu0 %v261
        %v299 = vpop.f32.mrf.mxu0
        %v300 = vadd.f32 %v280, %v299
        %301 = vdwg.mxu0
        %302 = vst.msk [vmem:[%s215] sm:$0xff] %vm229, %v300
        %s303 = sand.u32 %s137, 1
        %s304 = scalar_lea.sflag [#allocation3], %s303
        %s305 = sand.u32 %s137, 1
        %s306 = smul.addr %s305, 8
        %s307 = scalar_lea.vmem [#allocation2], %s306
        // Predicated region
        $region41: #{tpu_custom_call.1} parent=39 // pred_check
          %p308 = pneg %p147
        $region42: #{tpu_custom_call.1} parent=39 // pred_check_branch
          %310 = sbr.rel (%p308) target = $region44
        $region43: #{tpu_custom_call.1} parent=39 // pred_region
          %312 = vsyncadd %s304, 0
          %s313 = smul.addr %s19, 8
          %s314 = scalar_lea.hbm %s5, %s313
          %s316 = sshll.u32 %s307, 4
          %s317 = int_to_ptr.vmem [resolvable:$true] %s316
          %s318 = sshll.u32 %s314, 4
          %s319 = int_to_ptr.hbm [resolvable:$true] %s318
          %321 = dma.vmem_to_hbm [thread:$0]  %s317, 128, %s319, %s304
        $region44: #{tpu_custom_call.1} parent=39 // pred_fallthru
          _
      $region40: #{tpu_custom_call.1} parent=5 // pred_fallthru
        _
      %p322 = scmp.le.s32.totalorder 2, %s14
      // Predicated region
      $region45: #{tpu_custom_call.1} parent=5 // pred_check
        %p323 = pneg %p322
      $region46: #{tpu_custom_call.1} parent=5 // pred_check_branch
        %325 = sbr.rel (%p323) target = $region48
      $region47: #{tpu_custom_call.1} parent=5 // pred_region
        %s326 = ssub.s32 %s14, 2
        // Predicated region
        $region49: #{tpu_custom_call.1} parent=47 // pred_check
          %p327 = pneg %p153
        $region50: #{tpu_custom_call.1} parent=47 // pred_check_branch
          %329 = sbr.rel (%p327) target = $region52
        $region51: #{tpu_custom_call.1} parent=47 // pred_region
          %s330 = sand.u32 %s138, 1
          %s331 = scalar_lea.sflag [#allocation3], %s330
          %s332 = sand.u32 %s138, 1
          %s333 = smul.addr %s332, 8
          %s334 = scalar_lea.vmem [#allocation2], %s333
          %336 = dma.done %s331, 128
        $region52: #{tpu_custom_call.1} parent=47 // pred_fallthru
          _
      $region48: #{tpu_custom_call.1} parent=5 // pred_fallthru
        _
    $region6: #{tpu_custom_call.1} parent=1 // loop_footer
      %s18 = sadd.s32 1, %s14
    $region7: #{tpu_custom_call.1} parent=1 // loop_footer_branch
      %13 = sbr.rel target = $region3
    $region8: #{tpu_custom_call.1} parent=1 // loop_exit
      _
    %337 = vsyncpa [#allocation3], 1
    %s338 = scalar_lea.sflag [#allocation3], 1
    %339 = vsyncpa %s338, 1

// kernel: tpu_custom_call.1
$region0: #{tpu_custom_call.1}
  #allocation0 [shape = 'u32[]', space=smem, size = 0x4, offset = 0x4, fixed_abs, tag = 'smem constant byte address 0x4 - core index']
  #allocation1 [shape = 'u32[72,128]{1,0:T(1,128)}', space=vmem, size = 0x9000, scoped, tag = 'internal scratch']
  %s0 = inlined_call_operand.vmem [shape: f32[16,32], index: 0, kind: input, shape index: {}]
  %s1 = inlined_call_operand.vmem [shape: f32[32,128], index: 1, kind: input, shape index: {}]
  %s2 = inlined_call_operand.vmem [shape: f32[1,128], index: 2, kind: input, shape index: {}]
  %s3 = inlined_call_operand.vmem [shape: f32[128,32], index: 3, kind: input, shape index: {}]
  %s4 = inlined_call_operand.vmem [shape: f32[1,32], index: 4, kind: input, shape index: {}]
  %s5 = inlined_call_operand.hbm [shape: f32[16,32], index: 5, kind: output, shape index: {}]
  %s6 = sld [smem:[#allocation0]]
  $region53: #{tpu_custom_call.1} parent=0
    _
  %s8 = ssub.s32 1, %s6
  %s9 = scalar_select 0, %s8, %s6
  $region1: #{tpu_custom_call.1} parent=0
    #allocation2 [shape = 'u8[8192]{0}', space=vmem, size = 0x2000, scoped, tag = 'output window, operand 0']
    #allocation3 [shape = 's32[2]{0}', space=sflag, size = 0x8, scoped, tag = 'scoped memory for tpu_custom_call.1']
    %10 = vsyncpa [#allocation3], 0
    %s11 = scalar_lea.sflag [#allocation3], 1
    %12 = vsyncpa %s11, 0
    loop: start=0, step=1, limit=4
    $region2: #{tpu_custom_call.1} parent=1 // loop_pre_header
      _
    $region3: #{tpu_custom_call.1} parent=1 // loop_header
      %s14 = sphi 0, %s18
      %p15 = scmp.ge.s32.totalorder %s14, 4
      %s24 = sphi 0, %s26
      %s27 = sphi 0, %s24
      %s28 = sphi 0, %s27
      %s44 = sphi 0, %s28
      %s48 = sphi 0, %s48
      %s50 = sphi 0, %s48
      %s51 = sphi 0, %s50
      %s65 = sphi 0, %s51
      %s69 = sphi 0, %s69
      %s71 = sphi 0, %s69
      %s72 = sphi 0, %s71
      %s86 = sphi 0, %s72
      %s90 = sphi 0, %s90
      %s92 = sphi 0, %s90
      %s93 = sphi 0, %s92
      %s107 = sphi 0, %s93
      %s111 = sphi 0, %s111
      %s113 = sphi 0, %s111
      %s114 = sphi 0, %s113
      %s128 = sphi 0, %s114
      %s134 = sphi 0, %s136
      %s137 = sphi 0, %s134
      %s138 = sphi 0, %s137
      %s154 = sphi 0, %s138
    $region4: #{tpu_custom_call.1} parent=1 // loop_header_branch
      %17 = sbr.rel (%p15) target = $region8
    $region5: #{tpu_custom_call.1} parent=1 // loop_body
      %s19 = ssub.s32 %s14, 1
      %s20 = ssub.s32 %s14, 2
      %s21 = sadd.s32 %s14, 1
      %s22 = ssub.s32 %s14, %s21
      %p23 = scmp.eq.s32.totalorder %s22, 0
      %s25 = sadd.s32 %s24, 1
      %s26 = scalar_select %p23, %s24, %s25
      %p29 = pneg %p23
      %p30 = scmp.eq.s32.totalorder %s14, 1
      %p31 = por %p29, %p30
      %p32 = scmp.ne.s32.totalorder %s24, %s27
      %p33 = scmp.eq.s32.totalorder %s14, 0
      %p34 = por %p32, %p33
      %p35 = scmp.ne.s32.totalorder %s24, %s27
      %p36 = scmp.eq.s32.totalorder %s19, 1
      %p37 = por %p35, %p36
      %p38 = scmp.ne.s32.totalorder %s27, %s28
      %p39 = scmp.eq.s32.totalorder %s19, 0
      %p40 = por %p38, %p39
      %p41 = scmp.ne.s32.totalorder %s27, %s28
      %p42 = scmp.eq.s32.totalorder %s20, 1
      %p43 = por %p41, %p42
      %p45 = scmp.ne.s32.totalorder %s28, %s44
      %p46 = scmp.eq.s32.totalorder %s20, 0
      %p47 = por %p45, %p46
      %s49 = sadd.s32 %s48, 1
      %p52 = scmp.eq.s32.totalorder %s14, 1
      %p53 = scmp.ne.s32.totalorder %s48, %s50
      %p54 = scmp.eq.s32.totalorder %s14, 0
      %p55 = por %p53, %p54
      %p56 = scmp.ne.s32.totalorder %s48, %s50
      %p57 = scmp.eq.s32.totalorder %s19, 1
      %p58 = por %p56, %p57
      %p59 = scmp.ne.s32.totalorder %s50, %s51
      %p60 = scmp.eq.s32.totalorder %s19, 0
      %p61 = por %p59, %p60
      %p62 = scmp.ne.s32.totalorder %s50, %s51
      %p63 = scmp.eq.s32.totalorder %s20, 1
      %p64 = por %p62, %p63
      %p66 = scmp.ne.s32.totalorder %s51, %s65
      %p67 = scmp.eq.s32.totalorder %s20, 0
      %p68 = por %p66, %p67
      %s70 = sadd.s32 %s69, 1
      %p73 = scmp.eq.s32.totalorder %s14, 1
      %p74 = scmp.ne.s32.totalorder %s69, %s71
      %p75 = scmp.eq.s32.totalorder %s14, 0
      %p76 = por %p74, %p75
      %p77 = scmp.ne.s32.totalorder %s69, %s71
      %p78 = scmp.eq.s32.totalorder %s19, 1
      %p79 = por %p77, %p78
      %p80 = scmp.ne.s32.totalorder %s71, %s72
      %p81 = scmp.eq.s32.totalorder %s19, 0
      %p82 = por %p80, %p81
      %p83 = scmp.ne.s32.totalorder %s71, %s72
      %p84 = scmp.eq.s32.totalorder %s20, 1
      %p85 = por %p83, %p84
      %p87 = scmp.ne.s32.totalorder %s72, %s86
      %p88 = scmp.eq.s32.totalorder %s20, 0
      %p89 = por %p87, %p88
      %s91 = sadd.s32 %s90, 1
      %p94 = scmp.eq.s32.totalorder %s14, 1
      %p95 = scmp.ne.s32.totalorder %s90, %s92
      %p96 = scmp.eq.s32.totalorder %s14, 0
      %p97 = por %p95, %p96
      %p98 = scmp.ne.s32.totalorder %s90, %s92
      %p99 = scmp.eq.s32.totalorder %s19, 1
      %p100 = por %p98, %p99
      %p101 = scmp.ne.s32.totalorder %s92, %s93
      %p102 = scmp.eq.s32.totalorder %s19, 0
      %p103 = por %p101, %p102
      %p104 = scmp.ne.s32.totalorder %s92, %s93
      %p105 = scmp.eq.s32.totalorder %s20, 1
      %p106 = por %p104, %p105
      %p108 = scmp.ne.s32.totalorder %s93, %s107
      %p109 = scmp.eq.s32.totalorder %s20, 0
      %p110 = por %p108, %p109
      %s112 = sadd.s32 %s111, 1
      %p115 = scmp.eq.s32.totalorder %s14, 1
      %p116 = scmp.ne.s32.totalorder %s111, %s113
      %p117 = scmp.eq.s32.totalorder %s14, 0
      %p118 = por %p116, %p117
      %p119 = scmp.ne.s32.totalorder %s111, %s113
      %p120 = scmp.eq.s32.totalorder %s19, 1
      %p121 = por %p119, %p120
      %p122 = scmp.ne.s32.totalorder %s113, %s114
      %p123 = scmp.eq.s32.totalorder %s19, 0
      %p124 = por %p122, %p123
      %p125 = scmp.ne.s32.totalorder %s113, %s114
      %p126 = scmp.eq.s32.totalorder %s20, 1
      %p127 = por %p125, %p126
      %p129 = scmp.ne.s32.totalorder %s114, %s128
      %p130 = scmp.eq.s32.totalorder %s20, 0
      %p131 = por %p129, %p130
      %s132 = ssub.s32 %s14, %s21
      %p133 = scmp.eq.s32.totalorder %s132, 0
      %s135 = sadd.s32 %s134, 1
      %s136 = scalar_select %p133, %s134, %s135
      %p139 = pneg %p133
      %p140 = scmp.eq.s32.totalorder %s14, 1
      %p141 = por %p139, %p140
      %p142 = scmp.ne.s32.totalorder %s134, %s137
      %p143 = scmp.eq.s32.totalorder %s14, 0
      %p144 = por %p142, %p143
      %p145 = scmp.ne.s32.totalorder %s134, %s137
      %p146 = scmp.eq.s32.totalorder %s19, 1
      %p147 = por %p145, %p146
      %p148 = scmp.ne.s32.totalorder %s137, %s138
      %p149 = scmp.eq.s32.totalorder %s19, 0
      %p150 = por %p148, %p149
      %p151 = scmp.ne.s32.totalorder %s137, %s138
      %p152 = scmp.eq.s32.totalorder %s20, 1
      %p153 = por %p151, %p152
      %p155 = scmp.ne.s32.totalorder %s138, %s154
      %p156 = scmp.eq.s32.totalorder %s20, 0
      %p157 = por %p155, %p156
      %p158 = scmp.le.s32.totalorder 1, %s14
      %p159 = scmp.lt.s32.totalorder %s14, 3
      %p160 = pnand %p158, %p159
      %p161 = pneg %p160
      // Predicated region
      $region9: #{tpu_custom_call.1} parent=5 // pred_check
        _
      $region10: #{tpu_custom_call.1} parent=5 // pred_check_branch
        %163 = sbr.rel (%p160) target = $region12
      $region11: #{tpu_custom_call.1} parent=5 // pred_region
        %s164 = ssub.s32 %s14, 1
        // Predicated region
        $region13: #{tpu_custom_call.1} parent=11 // pred_check
          %p165 = pneg %p61
        $region14: #{tpu_custom_call.1} parent=11 // pred_check_branch
          %167 = sbr.rel (%p165) target = $region16
        $region15: #{tpu_custom_call.1} parent=11 // pred_region
          _
        $region16: #{tpu_custom_call.1} parent=11 // pred_fallthru
          _
        // Predicated region
        $region17: #{tpu_custom_call.1} parent=11 // pred_check
          %p168 = pneg %p82
        $region18: #{tpu_custom_call.1} parent=11 // pred_check_branch
          %170 = sbr.rel (%p168) target = $region20
        $region19: #{tpu_custom_call.1} parent=11 // pred_region
          _
        $region20: #{tpu_custom_call.1} parent=11 // pred_fallthru
          _
        // Predicated region
        $region21: #{tpu_custom_call.1} parent=11 // pred_check
          %p171 = pneg %p103
        $region22: #{tpu_custom_call.1} parent=11 // pred_check_branch
          %173 = sbr.rel (%p171) target = $region24
        $region23: #{tpu_custom_call.1} parent=11 // pred_region
          _
        $region24: #{tpu_custom_call.1} parent=11 // pred_fallthru
          _
        // Predicated region
        $region25: #{tpu_custom_call.1} parent=11 // pred_check
          %p174 = pneg %p124
        $region26: #{tpu_custom_call.1} parent=11 // pred_check_branch
          %176 = sbr.rel (%p174) target = $region28
        $region27: #{tpu_custom_call.1} parent=11 // pred_region
          _
        $region28: #{tpu_custom_call.1} parent=11 // pred_fallthru
          _
      $region12: #{tpu_custom_call.1} parent=5 // pred_fallthru
        _
      %p177 = scmp.lt.s32.totalorder %s14, 2
      // Predicated region
      $region29: #{tpu_custom_call.1} parent=5 // pred_check
        %p178 = pneg %p177
      $region30: #{tpu_custom_call.1} parent=5 // pred_check_branch
        %180 = sbr.rel (%p178) target = $region32
      $region31: #{tpu_custom_call.1} parent=5 // pred_region
        // Predicated region
        $region33: #{tpu_custom_call.1} parent=31 // pred_check
          %p181 = pneg %p34
        $region34: #{tpu_custom_call.1} parent=31 // pred_check_branch
          %183 = sbr.rel (%p181) target = $region36
        $region35: #{tpu_custom_call.1} parent=31 // pred_region
          %p184 = scmp.lt.s32.totalorder %s14, 1
          %s185 = scalar_select %p184, %s14, 1
          %s186 = smul.addr %s185, 8
          %s187 = scalar_lea.vmem %s0, %s186
        $region36: #{tpu_custom_call.1} parent=31 // pred_fallthru
          _
      $region32: #{tpu_custom_call.1} parent=5 // pred_fallthru
        _
      %p188 = scmp.le.s32.totalorder 1, %s14
      %p189 = scmp.lt.s32.totalorder %s14, 3
      %p190 = pnand %p188, %p189
      %p191 = pneg %p190
      // Predicated region
      $region37: #{tpu_custom_call.1} parent=5 // pred_check
        _
      $region38: #{tpu_custom_call.1} parent=5 // pred_check_branch
        %193 = sbr.rel (%p190) target = $region40
      $region39: #{tpu_custom_call.1} parent=5 // pred_region
        %s194 = ssub.s32 %s14, 1
        %p195 = scmp.lt.s32.totalorder %s19, 1
        %s196 = scalar_select %p195, %s19, 1
        %s197 = smul.addr %s196, 8
        %s198 = scalar_lea.vmem %s0, %s197
        %p199 = pneg %p40
        %p200 = pneg %p37
        %p201 = pneg %p61
        %p202 = pneg %p58
        %p203 = pneg %p82
        %p204 = pneg %p79
        %p205 = pneg %p103
        %p206 = pneg %p100
        %p207 = pneg %p124
        %p208 = pneg %p121
        %p209 = pneg %p150
        %p210 = pneg %p147
        %s211 = sand.u32 %s137, 1
        %s212 = scalar_lea.sflag [#allocation3], %s211
        %s213 = sand.u32 %s137, 1
        %s214 = smul.addr %s213, 8
        %s215 = scalar_lea.vmem [#allocation2], %s214
        %p216 = scmp.lt.s32.totalorder %s19, 1
        %s217 = scalar_select %p216, %s19, 1
        %s218 = smul.addr %s217, 8
        %s219 = scalar_lea.vmem %s0, %s218
        %v220 = vld [vmem:[%s219] sm:$0xff]
        %v221 = vld [vmem:[%s1] sm:$0xff]
        %v222 = vld [vmem:[%s1 + $0x8] sm:$0xff]
        %v223 = vld [vmem:[%s1 + $0x10] sm:$0xff]
        %v224 = vld [vmem:[%s1 + $0x18] sm:$0xff]
        %v225 = vld [vmem:[%s2] sm:$0x1]
        %v227 = vperm.slane %v225, 0
        %vm229 = vcmask 261120
        %v231 = vsel %vm229, %v220, 0
        %233 = vmatpush.msra.mxu0 0.0
        %234 = vmatpush.msra.mxu0 0.0
        %235 = vmatpush.msra.mxu0 0.0
        %236 = vmatpush.msra.mxu0 0.0
        %237 = vmatpush.msra.mxu0 0.0
        %238 = vmatpush.msra.mxu0 0.0
        %239 = vmatpush.msra.mxu0 0.0
        %240 = vmatpush.msra.mxu0 0.0
        %241 = vmatpush.msra.mxu0 0.0
        %242 = vmatpush.msra.mxu0 0.0
        %243 = vmatpush.msra.mxu0 0.0
        %244 = vmatpush.msra.mxu0 0.0
        %245 = vmatpush.msra.mxu0 %v224
        %246 = vmatpush.msra.mxu0 %v223
        %247 = vmatpush.msra.mxu0 %v222
        %248 = vmatpush.msra.mxu0 %v221
        %249 = vmatmul.f32.gmra.mxu0 %v231
        %v250 = vpop.f32.mrf.mxu0
        %v251 = vadd.f32 %v227, %v250
        %252 = vdwg.mxu0
        %v253 = vmul.f32 %v251, 0.5
        %v254 = vmul.f32 %v251, 0.044715
        %v255 = vmul.f32 %v254, %v251
        %v256 = vmul.f32 %v255, %v251
        %v257 = vadd.f32 %v251, %v256
        %v258 = vmul.f32 %v257, 0.7978846
        %v259 = vtanh.pop %v258
        %v260 = vadd.f32 %v259, 1.0
        %v261 = vmul.f32 %v253, %v260
        %v262 = vld [vmem:[%s3] sm:$0xff]
        %v263 = vld [vmem:[%s3 + $0x8] sm:$0xff]
        %v264 = vld [vmem:[%s3 + $0x10] sm:$0xff]
        %v265 = vld [vmem:[%s3 + $0x18] sm:$0xff]
        %v266 = vld [vmem:[%s3 + $0x20] sm:$0xff]
        %v267 = vld [vmem:[%s3 + $0x28] sm:$0xff]
        %v268 = vld [vmem:[%s3 + $0x30] sm:$0xff]
        %v269 = vld [vmem:[%s3 + $0x38] sm:$0xff]
        %v270 = vld [vmem:[%s3 + $0x40] sm:$0xff]
        %v271 = vld [vmem:[%s3 + $0x48] sm:$0xff]
        %v272 = vld [vmem:[%s3 + $0x50] sm:$0xff]
        %v273 = vld [vmem:[%s3 + $0x58] sm:$0xff]
        %v274 = vld [vmem:[%s3 + $0x60] sm:$0xff]
        %v275 = vld [vmem:[%s3 + $0x68] sm:$0xff]
        %v276 = vld [vmem:[%s3 + $0x70] sm:$0xff]
        %v277 = vld [vmem:[%s3 + $0x78] sm:$0xff]
        %v278 = vld [vmem:[%s4] sm:$0x1]
        %v280 = vperm.slane %v278, 0
        %282 = vmatpush.msra.mxu0 %v277
        %283 = vmatpush.msra.mxu0 %v276
        %284 = vmatpush.msra.mxu0 %v275
        %285 = vmatpush.msra.mxu0 %v274
        %286 = vmatpush.msra.mxu0 %v273
        %287 = vmatpush.msra.mxu0 %v272
        %288 = vmatpush.msra.mxu0 %v271
        %289 = vmatpush.msra.mxu0 %v270
        %290 = vmatpush.msra.mxu0 %v269
        %291 = vmatpush.msra.mxu0 %v268
        %292 = vmatpush.msra.mxu0 %v267
        %293 = vmatpush.msra.mxu0 %v266
        %294 = vmatpush.msra.mxu0 %v265
        %295 = vmatpush.msra.mxu0 %v264
        %296 = vmatpush.msra.mxu0 %v263
        %297 = vmatpush.msra.mxu0 %v262
        %298 = vmatmul.f32.gmra.mxu0 %v261
        %v299 = vpop.f32.mrf.mxu0
        %v300 = vadd.f32 %v280, %v299
        %301 = vdwg.mxu0
        %302 = vst.msk [vmem:[%s215] sm:$0xff] %vm229, %v300
        %s303 = sand.u32 %s137, 1
        %s304 = scalar_lea.sflag [#allocation3], %s303
        %s305 = sand.u32 %s137, 1
        %s306 = smul.addr %s305, 8
        %s307 = scalar_lea.vmem [#allocation2], %s306
        // Predicated region
        $region41: #{tpu_custom_call.1} parent=39 // pred_check
          %p308 = pneg %p147
        $region42: #{tpu_custom_call.1} parent=39 // pred_check_branch
          %310 = sbr.rel (%p308) target = $region44
        $region43: #{tpu_custom_call.1} parent=39 // pred_region
          %312 = vsyncadd %s304, 0
          %s313 = smul.addr %s19, 8
          %s314 = scalar_lea.hbm %s5, %s313
          %s316 = sshll.u32 %s307, 4
          %s317 = int_to_ptr.vmem [resolvable:$true] %s316
          %s318 = sshll.u32 %s314, 4
          %s319 = int_to_ptr.hbm [resolvable:$true] %s318
          %321 = dma.vmem_to_hbm [thread:$0]  %s317, 128, %s319, %s304
        $region44: #{tpu_custom_call.1} parent=39 // pred_fallthru
          _
      $region40: #{tpu_custom_call.1} parent=5 // pred_fallthru
        _
      %p322 = scmp.le.s32.totalorder 2, %s14
      // Predicated region
      $region45: #{tpu_custom_call.1} parent=5 // pred_check
        %p323 = pneg %p322
      $region46: #{tpu_custom_call.1} parent=5 // pred_check_branch
        %325 = sbr.rel (%p323) target = $region48
      $region47: #{tpu_custom_call.1} parent=5 // pred_region
        %s326 = ssub.s32 %s14, 2
        // Predicated region
        $region49: #{tpu_custom_call.1} parent=47 // pred_check
          %p327 = pneg %p153
        $region50: #{tpu_custom_call.1} parent=47 // pred_check_branch
          %329 = sbr.rel (%p327) target = $region52
        $region51: #{tpu_custom_call.1} parent=47 // pred_region
          %s330 = sand.u32 %s138, 1
          %s331 = scalar_lea.sflag [#allocation3], %s330
          %s332 = sand.u32 %s138, 1
          %s333 = smul.addr %s332, 8
          %s334 = scalar_lea.vmem [#allocation2], %s333
          %336 = dma.done %s331, 128
        $region52: #{tpu_custom_call.1} parent=47 // pred_fallthru
          _
      $region48: #{tpu_custom_call.1} parent=5 // pred_fallthru
        _
    $region6: #{tpu_custom_call.1} parent=1 // loop_footer
      %s18 = sadd.s32 1, %s14
    $region7: #{tpu_custom_call.1} parent=1 // loop_footer_branch
      %13 = sbr.rel target = $region3
    $region8: #{tpu_custom_call.1} parent=1 // loop_exit
      _
    %337 = vsyncpa [#allocation3], 1
    %s338 = scalar_lea.sflag [#allocation3], 1
    %339 = vsyncpa %s338, 1

</llo_original>
